<compile_context>
chip_gen: v7x
topology: tpu7x:2x2x1
jax: 0.10.0
libtpu: 0.0.40
codegen_flags: <defaults>
</compile_context>

<pallas_src>
import functools

import jax
import jax.numpy as jnp
from jax.experimental import pallas as pl
from jax.experimental.pallas import tpu as pltpu


def _round_up(v, m):
    return ((v + m - 1) // m) * m


def _ffn_kernel(x_ref, w1_ref, b1_ref, w2_ref, b2_ref, o_ref):
    # x_ref:  (tm, Fp)  bf16 row tile of flattened tokens
    # w1_ref: (Fp, Hp)  bf16 first linear weight (transposed for x @ W), resident
    # b1_ref: (1, Hp)   f32
    # w2_ref: (Hp, Op)  bf16 second linear weight (transposed), resident
    # b2_ref: (1, Op)   f32
    # o_ref:  (tm, Op)
    h = jnp.dot(x_ref[...], w1_ref[...],
                preferred_element_type=jnp.float32) + b1_ref[...]
    # SiLU in f32 (matches torch.nn.functional.silu; f32 VPU/EUP on all gens).
    h = h * jax.nn.sigmoid(h)
    y = jnp.dot(h.astype(w2_ref.dtype), w2_ref[...],
                preferred_element_type=jnp.float32) + b2_ref[...]
    # postact = 'none' -> identity
    o_ref[...] = y.astype(o_ref.dtype)


@functools.partial(jax.jit, static_argnames=("tm",))
def feed_forward(x, w1_t, b1, w2_t, b2, *, tm=256):
    """x: [..., F];  w1_t: [F, H];  b1: [H];  w2_t: [H, O];  b2: [O]."""
    orig_shape = x.shape
    F_in = orig_shape[-1]
    H = w1_t.shape[1]
    O = w2_t.shape[1]
    out_dtype = x.dtype

    x2d = x.reshape(-1, F_in)
    M = x2d.shape[0]

    # Lane-dense padding: last dims to multiples of 128 (unmasked vst, full MXU cols).
    Fp = _round_up(F_in, 128)
    Hp = _round_up(H, 128)
    Op = _round_up(O, 128)

    # Row tile: big by default to fill the MXU; shrink for tiny token counts so
    # we don't pad 16 tokens up to 256.  Pad M to a multiple of the tile.
    tm_eff = min(tm, _round_up(M, 8))
    M_pad = _round_up(M, tm_eff)

    # Zero-padding is semantics-preserving: padded feature cols of x multiply
    # zero weight rows; padded hidden cols get bias 0 -> silu(0)=0 -> contribute 0.
    x_p = jnp.pad(x2d, ((0, M_pad - M), (0, Fp - F_in))).astype(jnp.bfloat16)
    w1_p = jnp.pad(w1_t, ((0, Fp - F_in), (0, Hp - H))).astype(jnp.bfloat16)
    w2_p = jnp.pad(w2_t, ((0, Hp - H), (0, Op - O))).astype(jnp.bfloat16)
    b1_p = jnp.pad(b1, (0, Hp - H)).astype(jnp.float32).reshape(1, Hp)
    b2_p = jnp.pad(b2, (0, Op - O)).astype(jnp.float32).reshape(1, Op)

    grid = (M_pad // tm_eff,)

    # Conservative VMEM accounting (double-buffered tiles + resident bf16 weights),
    # capped at 64 MiB so the limit is valid on v7x as well.
    bytes_needed = (
        2 * tm_eff * Fp * 2            # x tiles, bf16, double-buffered
        + 2 * tm_eff * Op * 4          # out tiles, f32, double-buffered
        + 2 * (Fp * Hp + Hp * Op) * 2  # weights, bf16 (x2 buffering to be safe)
        + 2 * (Hp + Op) * 4            # biases, f32
        + tm_eff * Hp * 4              # f32 intermediate h
    )
    vmem_limit = int(min(max(2 * bytes_needed, 32 * 1024 * 1024),
                         64 * 1024 * 1024))

    cost = pl.CostEstimate(
        flops=2 * M_pad * (Fp * Hp + Hp * Op),
        transcendentals=M_pad * Hp,
        bytes_accessed=(M_pad * Fp * 2 + Fp * Hp * 2 + Hp * Op * 2
                        + Hp * 4 + Op * 4 + M_pad * Op * 4),
    )

    # TODO(synk): for very wide FFNs where bf16 W1+W2 exceed scoped VMEM (v7x),
    # add a hidden-dim grid axis streaming W1[:, th]/W2[th, :] tiles into an
    # f32 (tm, Op) accumulator with pl.when init/finalize.
    out = pl.pallas_call(
        _ffn_kernel,
        out_shape=jax.ShapeDtypeStruct((M_pad, Op), out_dtype),
        grid_spec=pltpu.PrefetchScalarGridSpec(
            num_scalar_prefetch=0,
            grid=grid,
            in_specs=[
                pl.BlockSpec((tm_eff, Fp), lambda i: (i, 0)),  # x row tile
                pl.BlockSpec((Fp, Hp), lambda i: (0, 0)),      # W1^T (resident)
                pl.BlockSpec((1, Hp), lambda i: (0, 0)),       # b1
                pl.BlockSpec((Hp, Op), lambda i: (0, 0)),      # W2^T (resident)
                pl.BlockSpec((1, Op), lambda i: (0, 0)),       # b2
            ],
            out_specs=pl.BlockSpec((tm_eff, Op), lambda i: (i, 0)),
        ),
        compiler_params=pltpu.CompilerParams(
            dimension_semantics=("parallel",),
            vmem_limit_bytes=vmem_limit,
        ),
        cost_estimate=cost,
    )(x_p, w1_p, b1_p, w2_p, b2_p)

    return out[:M, :O].reshape(*orig_shape[:-1], O)


def init_feed_forward_params(key, features, out_features=None, expand=1):
    """Deterministic init mirroring nn.Linear shapes (glu=False path)."""
    if out_features is None:
        out_features = features
    width = max(features, out_features)
    inner = width * expand  # glu=False => [inner, inner]

    k1, k2, k3, k4 = jax.random.split(key, 4)
    # PyTorch Linear weight shape is (out, in); we store transposed for x @ W.
    bound1 = 1.0 / jnp.sqrt(features)
    w1 = jax.random.uniform(k1, (inner, features), jnp.float32, -bound1, bound1)
    b1 = jax.random.uniform(k2, (inner,), jnp.float32, -bound1, bound1)
    bound2 = 1.0 / jnp.sqrt(inner)
    w2 = jax.random.uniform(k3, (out_features, inner), jnp.float32, -bound2, bound2)
    b2 = jax.random.uniform(k4, (out_features,), jnp.float32, -bound2, bound2)
    return w1.T, b1, w2.T, b2  # transposed weights for the kernel


if __name__ == "__main__":
    key = jax.random.PRNGKey(0)
    k_x, k_p = jax.random.split(key)

    batch, seq, features = 2, 8, 32
    x = jax.random.normal(k_x, (batch, seq, features), jnp.float32)

    w1_t, b1, w2_t, b2 = init_feed_forward_params(k_p, features)

    y = feed_forward(x, w1_t, b1, w2_t, b2)
    y = jax.block_until_ready(y)

    # Pure-JAX f32 reference of the exact forward semantics.  Kernel uses bf16
    # MXU operands with f32 accumulation, so tolerance is loosened accordingly.
    h_ref = x @ w1_t + b1
    h_ref = h_ref * jax.nn.sigmoid(h_ref)          # silu
    y_ref = h_ref @ w2_t + b2                      # postact = 'none'
    assert y.shape == (batch, seq, features)
    assert jnp.allclose(y, y_ref, atol=5e-2, rtol=5e-2), \
        float(jnp.max(jnp.abs(y - y_ref)))

    print("KERNEL_OK")
</pallas_src>

<mosaic_0001>
module attributes {stable_mosaic.version = 11 : i64} {
  func.func @_ffn_kernel(%arg0: i32, %arg1: memref<16x128xbf16, #tpu.memory_space<vmem>>, %arg2: memref<128x128xbf16, #tpu.memory_space<vmem>>, %arg3: memref<1x128xf32, #tpu.memory_space<vmem>>, %arg4: memref<128x128xbf16, #tpu.memory_space<vmem>>, %arg5: memref<1x128xf32, #tpu.memory_space<vmem>>, %arg6: memref<16x128xf32, #tpu.memory_space<vmem>>) attributes {dimension_semantics = [#tpu.dimension_semantics<parallel>], iteration_bounds = array<i64: 1>, scalar_prefetch = 0 : i64, scratch_operands = 0 : i64, tpu.core_type = #tpu.core_type<tc>, window_params = [{transform_indices = @transform_0, window_bounds = array<i64: 16, 128>}, {pipeline_mode = #tpu.pipeline_mode<synchronous>, transform_indices = @transform_1, window_bounds = array<i64: 128, 128>}, {pipeline_mode = #tpu.pipeline_mode<synchronous>, transform_indices = @transform_2, window_bounds = array<i64: 1, 128>}, {pipeline_mode = #tpu.pipeline_mode<synchronous>, transform_indices = @transform_3, window_bounds = array<i64: 128, 128>}, {pipeline_mode = #tpu.pipeline_mode<synchronous>, transform_indices = @transform_4, window_bounds = array<i64: 1, 128>}, {transform_indices = @transform_5, window_bounds = array<i64: 16, 128>}]} {
    %c0 = arith.constant 0 : index
    %c0_0 = arith.constant 0 : index
    %0 = vector.load %arg1[%c0, %c0_0] : memref<16x128xbf16, #tpu.memory_space<vmem>>, vector<16x128xbf16>
    %c0_1 = arith.constant 0 : index
    %c0_2 = arith.constant 0 : index
    %1 = vector.load %arg2[%c0_1, %c0_2] : memref<128x128xbf16, #tpu.memory_space<vmem>>, vector<128x128xbf16>
    %cst = arith.constant dense<0.000000e+00> : vector<16x128xf32>
    %2 = tpu.matmul %0, %1, %cst {dimension_numbers = #tpu.dot_dimension_numbers<[1], [0], [0], [1], [0, 0, 1, 1], [], []>} : vector<16x128xbf16>, vector<128x128xbf16>, vector<16x128xf32> -> vector<16x128xf32>
    %c0_3 = arith.constant 0 : index
    %c0_4 = arith.constant 0 : index
    %3 = vector.load %arg3[%c0_3, %c0_4] : memref<1x128xf32, #tpu.memory_space<vmem>>, vector<1x128xf32>
    %4 = vector.broadcast %3 : vector<1x128xf32> to vector<16x128xf32>
    %5 = arith.addf %2, %4 : vector<16x128xf32>
    %6 = arith.negf %5 : vector<16x128xf32>
    %7 = math.exp %6 : vector<16x128xf32>
    %cst_5 = arith.constant 1.000000e+00 : f32
    %8 = vector.broadcast %cst_5 : f32 to vector<16x128xf32>
    %9 = arith.addf %8, %7 : vector<16x128xf32>
    %10 = arith.divf %8, %9 : vector<16x128xf32>
    %11 = arith.mulf %5, %10 : vector<16x128xf32>
    %12 = arith.truncf %11 : vector<16x128xf32> to vector<16x128xbf16>
    %c0_6 = arith.constant 0 : index
    %c0_7 = arith.constant 0 : index
    %13 = vector.load %arg4[%c0_6, %c0_7] : memref<128x128xbf16, #tpu.memory_space<vmem>>, vector<128x128xbf16>
    %cst_8 = arith.constant dense<0.000000e+00> : vector<16x128xf32>
    %14 = tpu.matmul %12, %13, %cst_8 {dimension_numbers = #tpu.dot_dimension_numbers<[1], [0], [0], [1], [0, 0, 1, 1], [], []>} : vector<16x128xbf16>, vector<128x128xbf16>, vector<16x128xf32> -> vector<16x128xf32>
    %c0_9 = arith.constant 0 : index
    %c0_10 = arith.constant 0 : index
    %15 = vector.load %arg5[%c0_9, %c0_10] : memref<1x128xf32, #tpu.memory_space<vmem>>, vector<1x128xf32>
    %16 = vector.broadcast %15 : vector<1x128xf32> to vector<16x128xf32>
    %17 = arith.addf %14, %16 : vector<16x128xf32>
    %c0_11 = arith.constant 0 : index
    %c0_12 = arith.constant 0 : index
    %18 = vector.load %arg6[%c0_11, %c0_12] : memref<16x128xf32, #tpu.memory_space<vmem>>, vector<16x128xf32>
    tpu.vector_store %arg6[%c0_11, %c0_12], %17 {strides = array<i32>} : memref<16x128xf32, #tpu.memory_space<vmem>>, vector<16x128xf32>,
    return
  }
  func.func @transform_0(%arg0: i32) -> (i32, i32) {
    %c0_i32 = arith.constant 0 : i32
    %c0_i32_0 = arith.constant 0 : i32
    return %arg0, %c0_i32 : i32, i32
  }
  func.func @transform_1(%arg0: i32) -> (i32, i32) {
    %c0_i32 = arith.constant 0 : i32
    %c0_i32_0 = arith.constant 0 : i32
    %c0_i32_1 = arith.constant 0 : i32
    return %c0_i32, %c0_i32_0 : i32, i32
  }
  func.func @transform_2(%arg0: i32) -> (i32, i32) {
    %c0_i32 = arith.constant 0 : i32
    %c0_i32_0 = arith.constant 0 : i32
    %c0_i32_1 = arith.constant 0 : i32
    return %c0_i32, %c0_i32_0 : i32, i32
  }
  func.func @transform_3(%arg0: i32) -> (i32, i32) {
    %c0_i32 = arith.constant 0 : i32
    %c0_i32_0 = arith.constant 0 : i32
    %c0_i32_1 = arith.constant 0 : i32
    return %c0_i32, %c0_i32_0 : i32, i32
  }
  func.func @transform_4(%arg0: i32) -> (i32, i32) {
    %c0_i32 = arith.constant 0 : i32
    %c0_i32_0 = arith.constant 0 : i32
    %c0_i32_1 = arith.constant 0 : i32
    return %c0_i32, %c0_i32_0 : i32, i32
  }
  func.func @transform_5(%arg0: i32) -> (i32, i32) {
    %c0_i32 = arith.constant 0 : i32
    %c0_i32_0 = arith.constant 0 : i32
    return %arg0, %c0_i32 : i32, i32
  }
}

</mosaic_0001>

<llo_original>
// kernel: feed_forward.1
$region0: #{feed_forward.1}
  #allocation0 [shape = 'u32[]', space=smem, size = 0x4, offset = 0x4, fixed_abs, tag = 'smem constant byte address 0x4 - core index']
  #allocation1 [shape = 'u32[144,128]{1,0:T(1,128)}', space=vmem, size = 0x12000, scoped, tag = 'internal scratch']
  %s0 = inlined_call_operand.vmem [shape: bf16[16,128], index: 0, kind: input, shape index: {}]
  %s1 = inlined_call_operand.vmem [shape: bf16[128,128], index: 1, kind: input, shape index: {}]
  %s2 = inlined_call_operand.vmem [shape: f32[1,128], index: 2, kind: input, shape index: {}]
  %s3 = inlined_call_operand.vmem [shape: bf16[128,128], index: 3, kind: input, shape index: {}]
  %s4 = inlined_call_operand.vmem [shape: f32[1,128], index: 4, kind: input, shape index: {}]
  %s5 = inlined_call_operand.vmem [shape: f32[16,128], index: 5, kind: output, shape index: {}]
  %s6 = sld [smem:[#allocation0]]
  $region30: #{feed_forward.1} parent=0
    _
  %s8 = ssub.s32 1, %s6
  %s9 = scalar_select 0, %s8, %s6
  // Predicated region
  $region2: #{feed_forward.1} parent=0 // pred_check
    _
  $region3: #{feed_forward.1} parent=0 // pred_check_branch
    %11 = sbr.rel (0) target = $region5
  $region4: #{feed_forward.1} parent=0 // pred_region
    _
  $region5: #{feed_forward.1} parent=0 // pred_fallthru
    _
  // Predicated region
  $region6: #{feed_forward.1} parent=0 // pred_check
    _
  $region7: #{feed_forward.1} parent=0 // pred_check_branch
    %13 = sbr.rel (0) target = $region9
  $region8: #{feed_forward.1} parent=0 // pred_region
    _
  $region9: #{feed_forward.1} parent=0 // pred_fallthru
    _
  // Predicated region
  $region10: #{feed_forward.1} parent=0 // pred_check
    _
  $region11: #{feed_forward.1} parent=0 // pred_check_branch
    %15 = sbr.rel (0) target = $region13
  $region12: #{feed_forward.1} parent=0 // pred_region
    _
  $region13: #{feed_forward.1} parent=0 // pred_fallthru
    _
  // Predicated region
  $region14: #{feed_forward.1} parent=0 // pred_check
    _
  $region15: #{feed_forward.1} parent=0 // pred_check_branch
    %17 = sbr.rel (0) target = $region17
  $region16: #{feed_forward.1} parent=0 // pred_region
    _
  $region17: #{feed_forward.1} parent=0 // pred_fallthru
    _
  // Predicated region
  $region18: #{feed_forward.1} parent=0 // pred_check
    _
  $region19: #{feed_forward.1} parent=0 // pred_check_branch
    %19 = sbr.rel (0) target = $region21
  $region20: #{feed_forward.1} parent=0 // pred_region
    _
  $region21: #{feed_forward.1} parent=0 // pred_fallthru
    _
  %v21 = vld [vmem:[%s0] sm:$0xf]
  %v22 = vld [vmem:[%s0 + $0x4] sm:$0xf]
  %v23 = vld [vmem:[%s1] sm:$0xf]
  %v24 = vld [vmem:[%s1 + $0x4] sm:$0xf]
  %v25 = vld [vmem:[%s1 + $0x8] sm:$0xf]
  %v26 = vld [vmem:[%s1 + $0xc] sm:$0xf]
  %v27 = vld [vmem:[%s1 + $0x10] sm:$0xf]
  %v28 = vld [vmem:[%s1 + $0x14] sm:$0xf]
  %v29 = vld [vmem:[%s1 + $0x18] sm:$0xf]
  %v30 = vld [vmem:[%s1 + $0x1c] sm:$0xf]
  %v31 = vld [vmem:[%s1 + $0x20] sm:$0xf]
  %v32 = vld [vmem:[%s1 + $0x24] sm:$0xf]
  %v33 = vld [vmem:[%s1 + $0x28] sm:$0xf]
  %v34 = vld [vmem:[%s1 + $0x2c] sm:$0xf]
  %v35 = vld [vmem:[%s1 + $0x30] sm:$0xf]
  %v36 = vld [vmem:[%s1 + $0x34] sm:$0xf]
  %v37 = vld [vmem:[%s1 + $0x38] sm:$0xf]
  %v38 = vld [vmem:[%s1 + $0x3c] sm:$0xf]
  %v39 = vld [vmem:[%s2] sm:$0x1]
  %v41 = vlaneseq
  %v42 = vshrl.u32 %v41, 7
  %v43 = vsub.s32 0, %v42
  %v44 = vrot.slane %v39, %v43
  %v48 = vunpack.c.l.b16 %v21
  %v49 = vunpack.c.l.b16 %v22
  %v50 = vpack.c.b16 %v49, %v48
  %v68 = vunpack.c.l.b16 %v23
  %v69 = vunpack.c.l.b16 %v24
  %v70 = vunpack.c.l.b16 %v25
  %v71 = vunpack.c.l.b16 %v26
  %v72 = vunpack.c.l.b16 %v27
  %v73 = vunpack.c.l.b16 %v28
  %v74 = vunpack.c.l.b16 %v29
  %v75 = vunpack.c.l.b16 %v30
  %v76 = vunpack.c.l.b16 %v31
  %v77 = vunpack.c.l.b16 %v32
  %v78 = vunpack.c.l.b16 %v33
  %v79 = vunpack.c.l.b16 %v34
  %v80 = vunpack.c.l.b16 %v35
  %v81 = vunpack.c.l.b16 %v36
  %v82 = vunpack.c.l.b16 %v37
  %v83 = vunpack.c.l.b16 %v38
  %v84 = vpack.c.b16 %v69, %v68
  %v85 = vpack.c.b16 %v71, %v70
  %v86 = vpack.c.b16 %v73, %v72
  %v87 = vpack.c.b16 %v75, %v74
  %v88 = vpack.c.b16 %v77, %v76
  %v89 = vpack.c.b16 %v79, %v78
  %v90 = vpack.c.b16 %v81, %v80
  %v91 = vpack.c.b16 %v83, %v82
  %100 = vmatprep.subr.bf16.mxu0 0
  %101 = vmatpush1.bf16.msra.mxu0 %v84
  %102 = vmatprep.subr.bf16.mxu0 0
  %103 = vmatpush1.bf16.msra.mxu0 %v85
  %104 = vmatprep.subr.bf16.mxu0 0
  %105 = vmatpush1.bf16.msra.mxu0 %v86
  %106 = vmatprep.subr.bf16.mxu0 0
  %107 = vmatpush1.bf16.msra.mxu0 %v87
  %108 = vmatprep.subr.bf16.mxu0 0
  %109 = vmatpush1.bf16.msra.mxu0 %v88
  %110 = vmatprep.subr.bf16.mxu0 0
  %111 = vmatpush1.bf16.msra.mxu0 %v89
  %112 = vmatprep.subr.bf16.mxu0 0
  %113 = vmatpush1.bf16.msra.mxu0 %v90
  %114 = vmatprep.subr.bf16.mxu0 0
  %115 = vmatpush1.bf16.msra.mxu0 %v91
  %116 = vmatprep.subr.bf16.mxu0 0
  %117 = vmatpush1.bf16.msra.mxu0 0
  %118 = vmatprep.subr.bf16.mxu0 0
  %119 = vmatpush1.bf16.msra.mxu0 0
  %120 = vmatprep.subr.bf16.mxu0 0
  %121 = vmatpush1.bf16.msra.mxu0 0
  %122 = vmatprep.subr.bf16.mxu0 0
  %123 = vmatpush1.bf16.msra.mxu0 0
  %124 = vmatprep.subr.bf16.mxu0 0
  %125 = vmatpush1.bf16.msra.mxu0 0
  %126 = vmatprep.subr.bf16.mxu0 0
  %127 = vmatpush1.bf16.msra.mxu0 0
  %128 = vmatprep.subr.bf16.mxu0 0
  %129 = vmatpush1.bf16.msra.mxu0 0
  %130 = vmatprep.subr.bf16.mxu0 0
  %131 = vmatpush1.bf16.msra.mxu0 0
  %132 = vmatprep.mubr.bf16.mxu0 0
  %133 = vmatmul.mubr.bf16.gmra.mrb[0].mxu0 %v50
  %v134 = vpop.f32.mrb[0].mxu0
  %v135 = vadd.f32 %v44, %v134
  %v136 = vpop.f32.mrb[0].mxu0
  %v137 = vpop.f32.mrb[0].mxu0
  %v138 = vadd.f32 %v44, %v137
  %v139 = vpop.f32.mrb[0].mxu0
  %140 = vdwg.mxu0
  %v141 = vxor.u32 %v135, 2147483648
  %v142 = vxor.u32 %v138, 2147483648
  %v143 = vmul.f32 %v141, 1.442695
  %v144 = vpow.pop %v143
  %v145 = vmul.f32 %v142, 1.442695
  %v146 = vpow.pop %v145
  %v147 = vadd.f32 %v144, 1.0
  %v148 = vadd.f32 %v146, 1.0
  %v149 = vrcp.pop %v147
  %v150 = vmul.f32 1.0, %v149
  %v151 = vrcp.pop %v148
  %v152 = vmul.f32 1.0, %v151
  %v153 = vmul.f32 %v135, %v150
  %v154 = vmul.f32 %v138, %v152
  %v155 = vpack.c.bf16 %v154, %v153
  %v156 = vld [vmem:[%s3] sm:$0xf]
  %v157 = vld [vmem:[%s3 + $0x4] sm:$0xf]
  %v158 = vld [vmem:[%s3 + $0x8] sm:$0xf]
  %v159 = vld [vmem:[%s3 + $0xc] sm:$0xf]
  %v160 = vld [vmem:[%s3 + $0x10] sm:$0xf]
  %v161 = vld [vmem:[%s3 + $0x14] sm:$0xf]
  %v162 = vld [vmem:[%s3 + $0x18] sm:$0xf]
  %v163 = vld [vmem:[%s3 + $0x1c] sm:$0xf]
  %v164 = vld [vmem:[%s3 + $0x20] sm:$0xf]
  %v165 = vld [vmem:[%s3 + $0x24] sm:$0xf]
  %v166 = vld [vmem:[%s3 + $0x28] sm:$0xf]
  %v167 = vld [vmem:[%s3 + $0x2c] sm:$0xf]
  %v168 = vld [vmem:[%s3 + $0x30] sm:$0xf]
  %v169 = vld [vmem:[%s3 + $0x34] sm:$0xf]
  %v170 = vld [vmem:[%s3 + $0x38] sm:$0xf]
  %v171 = vld [vmem:[%s3 + $0x3c] sm:$0xf]
  %v172 = vld [vmem:[%s4] sm:$0x1]
  %v174 = vlaneseq
  %v175 = vshrl.u32 %v174, 7
  %v176 = vsub.s32 0, %v175
  %v177 = vrot.slane %v172, %v176
  %v195 = vunpack.c.l.b16 %v156
  %v196 = vunpack.c.l.b16 %v157
  %v197 = vunpack.c.l.b16 %v158
  %v198 = vunpack.c.l.b16 %v159
  %v199 = vunpack.c.l.b16 %v160
  %v200 = vunpack.c.l.b16 %v161
  %v201 = vunpack.c.l.b16 %v162
  %v202 = vunpack.c.l.b16 %v163
  %v203 = vunpack.c.l.b16 %v164
  %v204 = vunpack.c.l.b16 %v165
  %v205 = vunpack.c.l.b16 %v166
  %v206 = vunpack.c.l.b16 %v167
  %v207 = vunpack.c.l.b16 %v168
  %v208 = vunpack.c.l.b16 %v169
  %v209 = vunpack.c.l.b16 %v170
  %v210 = vunpack.c.l.b16 %v171
  %v211 = vpack.c.b16 %v196, %v195
  %v212 = vpack.c.b16 %v198, %v197
  %v213 = vpack.c.b16 %v200, %v199
  %v214 = vpack.c.b16 %v202, %v201
  %v215 = vpack.c.b16 %v204, %v203
  %v216 = vpack.c.b16 %v206, %v205
  %v217 = vpack.c.b16 %v208, %v207
  %v218 = vpack.c.b16 %v210, %v209
  %227 = vmatprep.subr.bf16.mxu0 0
  %228 = vmatpush1.bf16.msra.mxu0 %v211
  %229 = vmatprep.subr.bf16.mxu0 0
  %230 = vmatpush1.bf16.msra.mxu0 %v212
  %231 = vmatprep.subr.bf16.mxu0 0
  %232 = vmatpush1.bf16.msra.mxu0 %v213
  %233 = vmatprep.subr.bf16.mxu0 0
  %234 = vmatpush1.bf16.msra.mxu0 %v214
  %235 = vmatprep.subr.bf16.mxu0 0
  %236 = vmatpush1.bf16.msra.mxu0 %v215
  %237 = vmatprep.subr.bf16.mxu0 0
  %238 = vmatpush1.bf16.msra.mxu0 %v216
  %239 = vmatprep.subr.bf16.mxu0 0
  %240 = vmatpush1.bf16.msra.mxu0 %v217
  %241 = vmatprep.subr.bf16.mxu0 0
  %242 = vmatpush1.bf16.msra.mxu0 %v218
  %243 = vmatprep.subr.bf16.mxu0 0
  %244 = vmatpush1.bf16.msra.mxu0 0
  %245 = vmatprep.subr.bf16.mxu0 0
  %246 = vmatpush1.bf16.msra.mxu0 0
  %247 = vmatprep.subr.bf16.mxu0 0
  %248 = vmatpush1.bf16.msra.mxu0 0
  %249 = vmatprep.subr.bf16.mxu0 0
  %250 = vmatpush1.bf16.msra.mxu0 0
  %251 = vmatprep.subr.bf16.mxu0 0
  %252 = vmatpush1.bf16.msra.mxu0 0
  %253 = vmatprep.subr.bf16.mxu0 0
  %254 = vmatpush1.bf16.msra.mxu0 0
  %255 = vmatprep.subr.bf16.mxu0 0
  %256 = vmatpush1.bf16.msra.mxu0 0
  %257 = vmatprep.subr.bf16.mxu0 0
  %258 = vmatpush1.bf16.msra.mxu0 0
  %259 = vmatprep.mubr.bf16.mxu0 0
  %260 = vmatmul.mubr.bf16.gmra.mrb[0].mxu0 %v155
  %v261 = vpop.f32.mrb[0].mxu0
  %v262 = vadd.f32 %v177, %v261
  %v263 = vpop.f32.mrb[0].mxu0
  %v264 = vpop.f32.mrb[0].mxu0
  %v265 = vadd.f32 %v177, %v264
  %v266 = vpop.f32.mrb[0].mxu0
  %267 = vdwg.mxu0
  %268 = vst [vmem:[%s5] sm:$0xff] %v262
  %269 = vst [vmem:[%s5 + $0x8] sm:$0xff] %v265
  // Predicated region
  $region22: #{feed_forward.1} parent=0 // pred_check
    _
  $region23: #{feed_forward.1} parent=0 // pred_check_branch
    %271 = sbr.rel (0) target = $region25
  $region24: #{feed_forward.1} parent=0 // pred_region
    _
  $region25: #{feed_forward.1} parent=0 // pred_fallthru
    _
  // Predicated region
  $region26: #{feed_forward.1} parent=0 // pred_check
    _
  $region27: #{feed_forward.1} parent=0 // pred_check_branch
    %273 = sbr.rel (0) target = $region29
  $region28: #{feed_forward.1} parent=0 // pred_region
    _
  $region29: #{feed_forward.1} parent=0 // pred_fallthru
    _

</llo_original>
